<compile_context>
chip_gen: v7x
topology: tpu7x:2x2x1
jax: 0.10.0
libtpu: 0.0.40
codegen_flags: <defaults>
</compile_context>

<pallas_src>
import math

import jax
import jax.numpy as jnp
from jax import lax
from jax.experimental import pallas as pl
from jax.experimental.pallas import tpu as pltpu

# ---- hyperparameters (LinformerAttention(dim=32, num_heads=4, seq_len=8, k=4)) ----
DIM = 32
HEADS = 4
DIM_HEAD = DIM // HEADS          # lucidrains default: dim_head = dim // heads  -> 8
SEQ_LEN = 8
K_PROJ = 4
BATCH = 2
FF_MULT = 4
FF_HID = DIM * FF_MULT           # 128
LN_EPS = 1e-5
SCALE = DIM_HEAD ** -0.5

HD = HEADS * DIM_HEAD            # 32  (q/k/v width)
BN = BATCH * SEQ_LEN             # 16  (flattened rows)
BHK = BATCH * HEADS * K_PROJ     # 32  ("key slot" axis: (batch, head, k))
LANES = 128
NEG_BIG = 1e30

# ---- single parameter-slab row layout (all offsets are multiples of 8, lane offset 0) ----
R_WQKV = 0                       # (DIM, 3*HD)   fused [Wq*scale | Wk | Wv].T, ln1g folded
R_W1   = R_WQKV + DIM            # (DIM, FF_HID) FFN first weight, ln2g folded
R_W2   = R_W1 + DIM              # (FF_HID, DIM)
R_WO   = R_W2 + FF_HID           # (HD, DIM)
R_PBLK = R_WO + HD               # (2*BHK, 2*BN) block_diag(pk^T-blockdiag, pv^T-blockdiag)
R_HM2  = R_PBLK + 2 * BHK        # (2*BHK, HD)   per-head scatter mask, stacked twice
R_SEG  = R_HM2 + 2 * BHK         # (BHK, BHK)    same-head ones (softmax denominator)
R_VM   = R_SEG + BHK             # (BN, BHK)     same-batch 0/1 mask
R_AM   = R_VM + BN               # (BN, BHK)     additive mask: 0 valid, -1e30 cross-batch
R_BQKV = R_AM + BN               # row: ln1b-folded qkv bias (3*HD lanes)
R_BO   = R_BQKV + 8              # row: attention out-proj bias (DIM lanes)
R_B1   = R_BO + 8                # row: FFN hidden bias, ln2b folded (FF_HID lanes)
R_B2   = R_B1 + 8                # row: FFN out bias (DIM lanes)
SLAB_ROWS = R_B2 + 8             # 448 rows -> 448 x 128 x 4 B = 224 KiB


def _erf(x):
    # Abramowitz & Stegun 7.1.26 rational approximation (|err| <= 1.5e-7).
    # Used instead of lax.erf to stay on VPU/EUP-supported ops (exp only).
    a1, a2, a3, a4, a5 = 0.254829592, -0.284496736, 1.421413741, -1.453152027, 1.061405429
    p = 0.3275911
    ax = jnp.abs(x)
    t = 1.0 / (1.0 + p * ax)
    poly = ((((a5 * t + a4) * t + a3) * t + a2) * t + a1) * t
    y = 1.0 - poly * jnp.exp(-ax * ax)
    return jnp.where(x >= 0.0, y, -y)


def _gelu_exact(x):
    # torch nn.GELU default = exact (erf) GELU
    return 0.5 * x * (1.0 + _erf(x * 0.7071067811865476))


def _center_norm(v):
    # LayerNorm with the affine folded into the following weight matrix.
    mu = jnp.mean(v, axis=-1, keepdims=True)
    c = v - mu
    var = jnp.mean(c * c, axis=-1, keepdims=True)
    return c * lax.rsqrt(var + LN_EPS)


def linformer_block_kernel(x_ref, p_ref, o_ref):
    f32 = jnp.float32
    x = x_ref[...].astype(f32)                                        # (BN, DIM)

    # ---- unpack the single parameter slab (static, sublane-aligned row slices) ----
    wqkv = p_ref[R_WQKV:R_WQKV + DIM, 0:3 * HD]                       # (DIM, 3*HD)
    w1   = p_ref[R_W1:R_W1 + DIM, 0:FF_HID]                           # (DIM, FF_HID)
    w2   = p_ref[R_W2:R_W2 + FF_HID, 0:DIM]                           # (FF_HID, DIM)
    wo   = p_ref[R_WO:R_WO + HD, 0:DIM]                               # (HD, DIM)
    pblk = p_ref[R_PBLK:R_PBLK + 2 * BHK, 0:2 * BN]                   # (2*BHK, 2*BN)
    hm2  = p_ref[R_HM2:R_HM2 + 2 * BHK, 0:HD]                         # (2*BHK, HD)
    seg  = p_ref[R_SEG:R_SEG + BHK, 0:BHK]                            # (BHK, BHK)
    vm   = p_ref[R_VM:R_VM + BN, 0:BHK]                               # (BN, BHK)
    am   = p_ref[R_AM:R_AM + BN, 0:BHK]                               # (BN, BHK)
    bqkv = p_ref[R_BQKV:R_BQKV + 1, 0:3 * HD]                         # (1, 3*HD)
    bo   = p_ref[R_BO:R_BO + 1, 0:DIM]                                # (1, DIM)
    b1   = p_ref[R_B1:R_B1 + 1, 0:FF_HID]                             # (1, FF_HID)
    b2   = p_ref[R_B2:R_B2 + 1, 0:DIM]                                # (1, DIM)

    # ---------------- PreNorm + LinformerSelfAttention + residual ----------------
    xn = _center_norm(x)                                              # affine folded into wqkv

    qkv = jnp.dot(xn, wqkv, preferred_element_type=f32) + bqkv        # (BN, 3*HD), 1 MXU push
    q = qkv[:, 0:HD]                                                  # SCALE already folded
    kv = jnp.concatenate([qkv[:, HD:2 * HD], qkv[:, 2 * HD:3 * HD]], axis=0)  # (2*BN, HD)

    # Merged Linformer sequence projection for keys AND values (one matmul), followed by
    # the per-head block-diagonal scatter mask:
    #   kvbd[0:BHK]    = keys  laid out per (batch, head, k) slot
    #   kvbd[BHK:2BHK] = values laid out per (batch, head, k) slot
    kvbd = jnp.dot(pblk, kv, preferred_element_type=f32) * hm2        # (2*BHK, HD)
    kbd = kvbd[0:BHK, :]
    vbd = kvbd[BHK:2 * BHK, :]

    # All batches & heads in ONE scores matmul: dots[(b,n), (b',h,kk)].
    # Cross-batch lanes get -1e30 *before* the row max (review correctness fix).
    dots = jnp.dot(q, kbd.T, preferred_element_type=f32) + am         # (BN, BHK)
    p = jnp.exp(dots - jnp.max(dots, axis=-1, keepdims=True)) * vm    # exact 0 off-batch
    denom = jnp.dot(p, seg, preferred_element_type=f32)               # (BN, BHK), > 0 everywhere
    r = pl.reciprocal(denom, approx=True)                             # EUP slot
    r = r * (2.0 - denom * r)                                         # one Newton step -> ~f32 exact
    # TODO(synk): nn.Dropout(p=0.1) on attention weights omitted — eval/inference mode.
    heads = jnp.dot(p * r, vbd, preferred_element_type=f32)           # (BN, HD), head-concat layout

    x = x + jnp.dot(heads, wo, preferred_element_type=f32) + bo

    # ---------------- PreNorm + FeedForward + residual ----------------
    xn2 = _center_norm(x)                                             # affine folded into w1/b1
    h1 = _gelu_exact(jnp.dot(xn2, w1, preferred_element_type=f32) + b1)
    y = x + jnp.dot(h1, w2, preferred_element_type=f32) + b2

    o_ref[...] = y.astype(o_ref.dtype)


# ---------------- one-time host-side packing of torch-layout parameters ----------------
def pack_params(params):
    f32 = jnp.float32
    g1, b1ln = params["ln1g"][0], params["ln1b"][0]
    g2, b2ln = params["ln2g"][0], params["ln2b"][0]

    # SCALE folded into Wq; LN1 affine folded into Wqkv / bqkv.
    wqkv_t = jnp.concatenate(
        [(params["wq"] * SCALE).T, params["wk"].T, params["wv"].T], axis=1)   # (DIM, 3*HD)
    bqkv = b1ln @ wqkv_t                                                      # (3*HD,)
    wqkv_eff = g1[:, None] * wqkv_t

    # LN2 affine folded into W1 / b1.
    w1_t = params["w1"].T                                                     # (DIM, FF_HID)
    b1_eff = params["b1"][0] + b2ln @ w1_t
    w1_eff = g2[:, None] * w1_t

    w2_t = params["w2"].T                                                     # (FF_HID, DIM)
    wo_t = params["wo"].T                                                     # (HD, DIM)

    # pkxt[(b,h,kk), (b',n)] = pk[n,kk] * [b == b']  (batch block-diag, replicated per head)
    eye_b = jnp.eye(BATCH, dtype=f32)
    pkxt = jnp.kron(eye_b, jnp.tile(params["pk"].T, (HEADS, 1)))              # (BHK, BN)
    pvxt = jnp.kron(eye_b, jnp.tile(params["pv"].T, (HEADS, 1)))              # (BHK, BN)
    pblk = jnp.zeros((2 * BHK, 2 * BN), f32)
    pblk = pblk.at[0:BHK, 0:BN].set(pkxt).at[BHK:2 * BHK, BN:2 * BN].set(pvxt)

    slot_head = (jnp.arange(BHK) // K_PROJ) % HEADS        # head of key-slot (b,h,kk)
    slot_batch = jnp.arange(BHK) // (HEADS * K_PROJ)       # batch of key-slot
    col_head = jnp.arange(HD) // DIM_HEAD                  # head of q/k/v column
    row_batch = jnp.arange(BN) // SEQ_LEN                  # batch of flattened row

    hm = (slot_head[:, None] == col_head[None, :]).astype(f32)                # (BHK, HD)
    hm2 = jnp.concatenate([hm, hm], axis=0)                                   # (2*BHK, HD)
    seg = (slot_head[:, None] == slot_head[None, :]).astype(f32)              # (BHK, BHK)
    vm = (row_batch[:, None] == slot_batch[None, :]).astype(f32)              # (BN, BHK)
    am = (vm - 1.0) * NEG_BIG                                                  # 0 / -1e30

    slab = jnp.zeros((SLAB_ROWS, LANES), f32)
    slab = slab.at[R_WQKV:R_WQKV + DIM, 0:3 * HD].set(wqkv_eff)
    slab = slab.at[R_W1:R_W1 + DIM, 0:FF_HID].set(w1_eff)
    slab = slab.at[R_W2:R_W2 + FF_HID, 0:DIM].set(w2_t)
    slab = slab.at[R_WO:R_WO + HD, 0:DIM].set(wo_t)
    slab = slab.at[R_PBLK:R_PBLK + 2 * BHK, 0:2 * BN].set(pblk)
    slab = slab.at[R_HM2:R_HM2 + 2 * BHK, 0:HD].set(hm2)
    slab = slab.at[R_SEG:R_SEG + BHK, 0:BHK].set(seg)
    slab = slab.at[R_VM:R_VM + BN, 0:BHK].set(vm)
    slab = slab.at[R_AM:R_AM + BN, 0:BHK].set(am)
    slab = slab.at[R_BQKV, 0:3 * HD].set(bqkv)
    slab = slab.at[R_BO, 0:DIM].set(params["bo"][0])
    slab = slab.at[R_B1, 0:FF_HID].set(b1_eff)
    slab = slab.at[R_B2, 0:DIM].set(params["b2"][0])
    return slab


def linformer_attention(x, slab):
    """x: (B, SEQ_LEN, DIM) float32 -> (B, SEQ_LEN, DIM) float32."""
    B, N, D = x.shape
    assert (B, N, D) == (BATCH, SEQ_LEN, DIM)
    x_flat = x.reshape(B * N, D)

    cost = pl.CostEstimate(
        flops=650_000, transcendentals=3_200,
        bytes_accessed=int(slab.size * 4 + 2 * x_flat.size * 4))

    out_flat = pl.pallas_call(
        linformer_block_kernel,
        out_shape=jax.ShapeDtypeStruct((B * N, D), x.dtype),
        # grid-less call: whole problem in a single invocation, full arrays in VMEM
        in_specs=[pl.BlockSpec(memory_space=pltpu.MemorySpace.VMEM),
                  pl.BlockSpec(memory_space=pltpu.MemorySpace.VMEM)],
        out_specs=pl.BlockSpec(memory_space=pltpu.MemorySpace.VMEM),
        cost_estimate=cost,
    )(x_flat, slab)
    return out_flat.reshape(B, N, D)


# ---------------- deterministic parameter init (torch layout) ----------------
def init_params(key):
    ks = jax.random.split(key, 11)

    def u(k, shape, bound):
        return jax.random.uniform(k, shape, jnp.float32, -bound, bound)

    hd = HEADS * DIM_HEAD
    return dict(
        wq=u(ks[0], (hd, DIM), 1.0 / math.sqrt(DIM)),
        wk=u(ks[1], (hd, DIM), 1.0 / math.sqrt(DIM)),
        wv=u(ks[2], (hd, DIM), 1.0 / math.sqrt(DIM)),
        pk=u(ks[3], (SEQ_LEN, K_PROJ), 1.0 / math.sqrt(K_PROJ)),
        pv=u(ks[4], (SEQ_LEN, K_PROJ), 1.0 / math.sqrt(K_PROJ)),
        wo=u(ks[5], (DIM, hd), 1.0 / math.sqrt(hd)),
        bo=u(ks[6], (1, DIM), 1.0 / math.sqrt(hd)),
        ln1g=jnp.ones((1, DIM), jnp.float32),
        ln1b=jnp.zeros((1, DIM), jnp.float32),
        w1=u(ks[7], (DIM * FF_MULT, DIM), 1.0 / math.sqrt(DIM)),
        b1=u(ks[8], (1, DIM * FF_MULT), 1.0 / math.sqrt(DIM)),
        w2=u(ks[9], (DIM, DIM * FF_MULT), 1.0 / math.sqrt(DIM * FF_MULT)),
        b2=u(ks[10], (1, DIM), 1.0 / math.sqrt(DIM * FF_MULT)),
        ln2g=jnp.ones((1, DIM), jnp.float32),
        ln2b=jnp.zeros((1, DIM), jnp.float32),
    )


# ---------------- pure-JAX reference (mirrors the torch graph) ----------------
def reference(x, p):
    def ln(v, g, b):
        mu = v.mean(-1, keepdims=True)
        var = ((v - mu) ** 2).mean(-1, keepdims=True)
        return (v - mu) / jnp.sqrt(var + LN_EPS) * g[0] + b[0]

    B, N, _ = x.shape
    xn = ln(x, p["ln1g"], p["ln1b"])
    q = xn @ p["wq"].T
    k = xn @ p["wk"].T
    v = xn @ p["wv"].T
    keys = jnp.einsum("bnd,nk->bkd", k, p["pk"])
    vals = jnp.einsum("bnd,nk->bkd", v, p["pv"])
    q = q.reshape(B, N, HEADS, DIM_HEAD).transpose(0, 2, 1, 3)
    keys = keys.reshape(B, K_PROJ, HEADS, DIM_HEAD).transpose(0, 2, 1, 3)
    vals = vals.reshape(B, K_PROJ, HEADS, DIM_HEAD).transpose(0, 2, 1, 3)
    dots = jnp.einsum("bhnd,bhkd->bhnk", q, keys) * SCALE
    attn = jax.nn.softmax(dots, axis=-1)
    out = jnp.einsum("bhnk,bhkd->bhnd", attn, vals)
    out = out.transpose(0, 2, 1, 3).reshape(B, N, -1)
    x = x + out @ p["wo"].T + p["bo"][0]
    xn2 = ln(x, p["ln2g"], p["ln2b"])
    h1 = jax.nn.gelu(xn2 @ p["w1"].T + p["b1"][0], approximate=False)
    return x + h1 @ p["w2"].T + p["b2"][0]


if __name__ == "__main__":
    key = jax.random.PRNGKey(0)
    kx, kp = jax.random.split(key)
    x = jax.random.normal(kx, (BATCH, SEQ_LEN, DIM), jnp.float32)
    params = init_params(kp)

    slab = pack_params(params)            # one-time host-side parameter packing
    out = linformer_attention(x, slab)
    out = jax.block_until_ready(out)

    ref = reference(x, params)
    assert out.shape == (BATCH, SEQ_LEN, DIM)
    err = jnp.max(jnp.abs(out - ref))
    assert jnp.allclose(out, ref, atol=1e-4, rtol=1e-4), f"max abs err = {err}"
    print("KERNEL_OK")
</pallas_src>

<mosaic_0001>
module attributes {stable_mosaic.version = 11 : i64} {
  func.func @linformer_block_kernel(%arg0: memref<16x32xf32, #tpu.memory_space<vmem>>, %arg1: memref<448x128xf32, #tpu.memory_space<vmem>>, %arg2: memref<16x32xf32, #tpu.memory_space<vmem>>) attributes {dimension_semantics = [], scalar_prefetch = 0 : i64, scratch_operands = 0 : i64, tpu.core_type = #tpu.core_type<tc>} {
    %c0 = arith.constant 0 : index
    %c0_0 = arith.constant 0 : index
    %0 = vector.load %arg0[%c0, %c0_0] : memref<16x32xf32, #tpu.memory_space<vmem>>, vector<16x32xf32>
    %c0_1 = arith.constant 0 : index
    %c0_2 = arith.constant 0 : index
    %1 = vector.load %arg1[%c0_1, %c0_2] : memref<448x128xf32, #tpu.memory_space<vmem>>, vector<32x96xf32>
    %c32 = arith.constant 32 : index
    %c0_3 = arith.constant 0 : index
    %2 = vector.load %arg1[%c32, %c0_3] : memref<448x128xf32, #tpu.memory_space<vmem>>, vector<32x128xf32>
    %c64 = arith.constant 64 : index
    %c0_4 = arith.constant 0 : index
    %3 = vector.load %arg1[%c64, %c0_4] : memref<448x128xf32, #tpu.memory_space<vmem>>, vector<128x32xf32>
    %c192 = arith.constant 192 : index
    %c0_5 = arith.constant 0 : index
    %4 = vector.load %arg1[%c192, %c0_5] : memref<448x128xf32, #tpu.memory_space<vmem>>, vector<32x32xf32>
    %c224 = arith.constant 224 : index
    %c0_6 = arith.constant 0 : index
    %5 = vector.load %arg1[%c224, %c0_6] : memref<448x128xf32, #tpu.memory_space<vmem>>, vector<64x32xf32>
    %c288 = arith.constant 288 : index
    %c0_7 = arith.constant 0 : index
    %6 = vector.load %arg1[%c288, %c0_7] : memref<448x128xf32, #tpu.memory_space<vmem>>, vector<64x32xf32>
    %c352 = arith.constant 352 : index
    %c0_8 = arith.constant 0 : index
    %7 = vector.load %arg1[%c352, %c0_8] : memref<448x128xf32, #tpu.memory_space<vmem>>, vector<32x32xf32>
    %c384 = arith.constant 384 : index
    %c0_9 = arith.constant 0 : index
    %8 = vector.load %arg1[%c384, %c0_9] : memref<448x128xf32, #tpu.memory_space<vmem>>, vector<16x32xf32>
    %c400 = arith.constant 400 : index
    %c0_10 = arith.constant 0 : index
    %9 = vector.load %arg1[%c400, %c0_10] : memref<448x128xf32, #tpu.memory_space<vmem>>, vector<16x32xf32>
    %c416 = arith.constant 416 : index
    %c0_11 = arith.constant 0 : index
    %10 = vector.load %arg1[%c416, %c0_11] : memref<448x128xf32, #tpu.memory_space<vmem>>, vector<1x96xf32>
    %c424 = arith.constant 424 : index
    %c0_12 = arith.constant 0 : index
    %11 = vector.load %arg1[%c424, %c0_12] : memref<448x128xf32, #tpu.memory_space<vmem>>, vector<1x32xf32>
    %c432 = arith.constant 432 : index
    %c0_13 = arith.constant 0 : index
    %12 = vector.load %arg1[%c432, %c0_13] : memref<448x128xf32, #tpu.memory_space<vmem>>, vector<1x128xf32>
    %c440 = arith.constant 440 : index
    %c0_14 = arith.constant 0 : index
    %13 = vector.load %arg1[%c440, %c0_14] : memref<448x128xf32, #tpu.memory_space<vmem>>, vector<1x32xf32>
    %cst = arith.constant dense<0.000000e+00> : vector<16xf32>
    %14 = vector.multi_reduction <add>, %0, %cst [1] : vector<16x32xf32> to vector<16xf32>
    %15 = vector.shape_cast %14 : vector<16xf32> to vector<16x1xf32>
    %cst_15 = arith.constant 3.200000e+01 : f32
    %16 = vector.broadcast %cst_15 : f32 to vector<16x1xf32>
    %17 = arith.divf %15, %16 : vector<16x1xf32>
    %18 = vector.broadcast %17 : vector<16x1xf32> to vector<16x32xf32>
    %19 = arith.subf %0, %18 : vector<16x32xf32>
    %20 = arith.mulf %19, %19 : vector<16x32xf32>
    %cst_16 = arith.constant dense<0.000000e+00> : vector<16xf32>
    %21 = vector.multi_reduction <add>, %20, %cst_16 [1] : vector<16x32xf32> to vector<16xf32>
    %22 = vector.shape_cast %21 : vector<16xf32> to vector<16x1xf32>
    %cst_17 = arith.constant 3.200000e+01 : f32
    %23 = vector.broadcast %cst_17 : f32 to vector<16x1xf32>
    %24 = arith.divf %22, %23 : vector<16x1xf32>
    %cst_18 = arith.constant 9.99999974E-6 : f32
    %25 = vector.broadcast %cst_18 : f32 to vector<16x1xf32>
    %26 = arith.addf %24, %25 : vector<16x1xf32>
    %27 = math.rsqrt %26 : vector<16x1xf32>
    %28 = vector.broadcast %27 : vector<16x1xf32> to vector<16x32xf32>
    %29 = arith.mulf %19, %28 : vector<16x32xf32>
    %cst_19 = arith.constant dense<0.000000e+00> : vector<16x96xf32>
    %30 = tpu.matmul %29, %1, %cst_19 {dimension_numbers = #tpu.dot_dimension_numbers<[1], [0], [0], [1], [0, 0, 1, 1], [], []>} : vector<16x32xf32>, vector<32x96xf32>, vector<16x96xf32> -> vector<16x96xf32>
    %31 = vector.broadcast %10 : vector<1x96xf32> to vector<16x96xf32>
    %32 = arith.addf %30, %31 : vector<16x96xf32>
    %33 = vector.extract_strided_slice %32 {offsets = [0, 0], sizes = [16, 32], strides = [1, 1]} : vector<16x96xf32> to vector<16x32xf32>
    %34 = vector.extract_strided_slice %32 {offsets = [0, 32], sizes = [16, 32], strides = [1, 1]} : vector<16x96xf32> to vector<16x32xf32>
    %35 = vector.extract_strided_slice %32 {offsets = [0, 64], sizes = [16, 32], strides = [1, 1]} : vector<16x96xf32> to vector<16x32xf32>
    %36 = tpu.concatenate %34, %35 in 0 : vector<16x32xf32>, vector<16x32xf32> -> vector<32x32xf32>
    %cst_20 = arith.constant dense<0.000000e+00> : vector<64x32xf32>
    %37 = tpu.matmul %5, %36, %cst_20 {dimension_numbers = #tpu.dot_dimension_numbers<[1], [0], [0], [1], [0, 0, 1, 1], [], []>} : vector<64x32xf32>, vector<32x32xf32>, vector<64x32xf32> -> vector<64x32xf32>
    %38 = arith.mulf %37, %6 : vector<64x32xf32>
    %39 = vector.extract_strided_slice %38 {offsets = [0, 0], sizes = [32, 32], strides = [1, 1]} : vector<64x32xf32> to vector<32x32xf32>
    %40 = vector.extract_strided_slice %38 {offsets = [32, 0], sizes = [32, 32], strides = [1, 1]} : vector<64x32xf32> to vector<32x32xf32>
    %41 = tpu.transpose %39, [1, 0] : vector<32x32xf32> -> vector<32x32xf32>
    %cst_21 = arith.constant dense<0.000000e+00> : vector<16x32xf32>
    %42 = tpu.matmul %33, %41, %cst_21 {dimension_numbers = #tpu.dot_dimension_numbers<[1], [0], [0], [1], [0, 0, 1, 1], [], []>} : vector<16x32xf32>, vector<32x32xf32>, vector<16x32xf32> -> vector<16x32xf32>
    %43 = arith.addf %42, %9 : vector<16x32xf32>
    %cst_22 = arith.constant dense<0xFF800000> : vector<16xf32>
    %44 = vector.multi_reduction <maximumf>, %43, %cst_22 [1] : vector<16x32xf32> to vector<16xf32>
    %45 = vector.shape_cast %44 : vector<16xf32> to vector<16x1xf32>
    %46 = vector.broadcast %45 : vector<16x1xf32> to vector<16x32xf32>
    %47 = arith.subf %43, %46 : vector<16x32xf32>
    %48 = math.exp %47 : vector<16x32xf32>
    %49 = arith.mulf %48, %8 : vector<16x32xf32>
    %cst_23 = arith.constant dense<0.000000e+00> : vector<16x32xf32>
    %50 = tpu.matmul %49, %7, %cst_23 {dimension_numbers = #tpu.dot_dimension_numbers<[1], [0], [0], [1], [0, 0, 1, 1], [], []>} : vector<16x32xf32>, vector<32x32xf32>, vector<16x32xf32> -> vector<16x32xf32>
    %51 = tpu.reciprocal %50 {approx = true} : vector<16x32xf32> -> vector<16x32xf32>
    %52 = arith.mulf %50, %51 : vector<16x32xf32>
    %cst_24 = arith.constant 2.000000e+00 : f32
    %53 = vector.broadcast %cst_24 : f32 to vector<16x32xf32>
    %54 = arith.subf %53, %52 : vector<16x32xf32>
    %55 = arith.mulf %51, %54 : vector<16x32xf32>
    %56 = arith.mulf %49, %55 : vector<16x32xf32>
    %cst_25 = arith.constant dense<0.000000e+00> : vector<16x32xf32>
    %57 = tpu.matmul %56, %40, %cst_25 {dimension_numbers = #tpu.dot_dimension_numbers<[1], [0], [0], [1], [0, 0, 1, 1], [], []>} : vector<16x32xf32>, vector<32x32xf32>, vector<16x32xf32> -> vector<16x32xf32>
    %cst_26 = arith.constant dense<0.000000e+00> : vector<16x32xf32>
    %58 = tpu.matmul %57, %4, %cst_26 {dimension_numbers = #tpu.dot_dimension_numbers<[1], [0], [0], [1], [0, 0, 1, 1], [], []>} : vector<16x32xf32>, vector<32x32xf32>, vector<16x32xf32> -> vector<16x32xf32>
    %59 = arith.addf %0, %58 : vector<16x32xf32>
    %60 = vector.broadcast %11 : vector<1x32xf32> to vector<16x32xf32>
    %61 = arith.addf %59, %60 : vector<16x32xf32>
    %cst_27 = arith.constant dense<0.000000e+00> : vector<16xf32>
    %62 = vector.multi_reduction <add>, %61, %cst_27 [1] : vector<16x32xf32> to vector<16xf32>
    %63 = vector.shape_cast %62 : vector<16xf32> to vector<16x1xf32>
    %cst_28 = arith.constant 3.200000e+01 : f32
    %64 = vector.broadcast %cst_28 : f32 to vector<16x1xf32>
    %65 = arith.divf %63, %64 : vector<16x1xf32>
    %66 = vector.broadcast %65 : vector<16x1xf32> to vector<16x32xf32>
    %67 = arith.subf %61, %66 : vector<16x32xf32>
    %68 = arith.mulf %67, %67 : vector<16x32xf32>
    %cst_29 = arith.constant dense<0.000000e+00> : vector<16xf32>
    %69 = vector.multi_reduction <add>, %68, %cst_29 [1] : vector<16x32xf32> to vector<16xf32>
    %70 = vector.shape_cast %69 : vector<16xf32> to vector<16x1xf32>
    %cst_30 = arith.constant 3.200000e+01 : f32
    %71 = vector.broadcast %cst_30 : f32 to vector<16x1xf32>
    %72 = arith.divf %70, %71 : vector<16x1xf32>
    %cst_31 = arith.constant 9.99999974E-6 : f32
    %73 = vector.broadcast %cst_31 : f32 to vector<16x1xf32>
    %74 = arith.addf %72, %73 : vector<16x1xf32>
    %75 = math.rsqrt %74 : vector<16x1xf32>
    %76 = vector.broadcast %75 : vector<16x1xf32> to vector<16x32xf32>
    %77 = arith.mulf %67, %76 : vector<16x32xf32>
    %cst_32 = arith.constant dense<0.000000e+00> : vector<16x128xf32>
    %78 = tpu.matmul %77, %2, %cst_32 {dimension_numbers = #tpu.dot_dimension_numbers<[1], [0], [0], [1], [0, 0, 1, 1], [], []>} : vector<16x32xf32>, vector<32x128xf32>, vector<16x128xf32> -> vector<16x128xf32>
    %79 = vector.broadcast %12 : vector<1x128xf32> to vector<16x128xf32>
    %80 = arith.addf %78, %79 : vector<16x128xf32>
    %cst_33 = arith.constant 5.000000e-01 : f32
    %81 = vector.broadcast %cst_33 : f32 to vector<16x128xf32>
    %82 = arith.mulf %81, %80 : vector<16x128xf32>
    %cst_34 = arith.constant 0.707106769 : f32
    %83 = vector.broadcast %cst_34 : f32 to vector<16x128xf32>
    %84 = arith.mulf %80, %83 : vector<16x128xf32>
    %85 = math.absf %84 : vector<16x128xf32>
    %cst_35 = arith.constant 0.327591091 : f32
    %86 = vector.broadcast %cst_35 : f32 to vector<16x128xf32>
    %87 = arith.mulf %86, %85 : vector<16x128xf32>
    %cst_36 = arith.constant 1.000000e+00 : f32
    %88 = vector.broadcast %cst_36 : f32 to vector<16x128xf32>
    %89 = arith.addf %88, %87 : vector<16x128xf32>
    %cst_37 = arith.constant 1.000000e+00 : f32
    %90 = vector.broadcast %cst_37 : f32 to vector<16x128xf32>
    %91 = arith.divf %90, %89 : vector<16x128xf32>
    %cst_38 = arith.constant 1.06140542 : f32
    %92 = vector.broadcast %cst_38 : f32 to vector<16x128xf32>
    %93 = arith.mulf %92, %91 : vector<16x128xf32>
    %cst_39 = arith.constant -1.45315206 : f32
    %94 = vector.broadcast %cst_39 : f32 to vector<16x128xf32>
    %95 = arith.addf %93, %94 : vector<16x128xf32>
    %96 = arith.mulf %95, %91 : vector<16x128xf32>
    %cst_40 = arith.constant 1.42141378 : f32
    %97 = vector.broadcast %cst_40 : f32 to vector<16x128xf32>
    %98 = arith.addf %96, %97 : vector<16x128xf32>
    %99 = arith.mulf %98, %91 : vector<16x128xf32>
    %cst_41 = arith.constant -0.284496725 : f32
    %100 = vector.broadcast %cst_41 : f32 to vector<16x128xf32>
    %101 = arith.addf %99, %100 : vector<16x128xf32>
    %102 = arith.mulf %101, %91 : vector<16x128xf32>
    %cst_42 = arith.constant 0.254829586 : f32
    %103 = vector.broadcast %cst_42 : f32 to vector<16x128xf32>
    %104 = arith.addf %102, %103 : vector<16x128xf32>
    %105 = arith.mulf %104, %91 : vector<16x128xf32>
    %cst_43 = arith.constant 0.000000e+00 : f32
    %106 = vector.broadcast %cst_43 : f32 to vector<16x128xf32>
    %107 = arith.subf %106, %85 : vector<16x128xf32>
    %108 = arith.mulf %107, %85 : vector<16x128xf32>
    %109 = math.exp %108 : vector<16x128xf32>
    %110 = arith.mulf %105, %109 : vector<16x128xf32>
    %cst_44 = arith.constant 1.000000e+00 : f32
    %111 = vector.broadcast %cst_44 : f32 to vector<16x128xf32>
    %112 = arith.subf %111, %110 : vector<16x128xf32>
    %cst_45 = arith.constant 0.000000e+00 : f32
    %113 = vector.broadcast %cst_45 : f32 to vector<16x128xf32>
    %114 = arith.cmpf oge, %84, %113 : vector<16x128xf32>
    %cst_46 = arith.constant 0.000000e+00 : f32
    %115 = vector.broadcast %cst_46 : f32 to vector<16x128xf32>
    %116 = arith.subf %115, %112 : vector<16x128xf32>
    %117 = arith.select %114, %112, %116 : vector<16x128xi1>, vector<16x128xf32>
    %cst_47 = arith.constant 1.000000e+00 : f32
    %118 = vector.broadcast %cst_47 : f32 to vector<16x128xf32>
    %119 = arith.addf %118, %117 : vector<16x128xf32>
    %120 = arith.mulf %82, %119 : vector<16x128xf32>
    %cst_48 = arith.constant dense<0.000000e+00> : vector<16x32xf32>
    %121 = tpu.matmul %120, %3, %cst_48 {dimension_numbers = #tpu.dot_dimension_numbers<[1], [0], [0], [1], [0, 0, 1, 1], [], []>} : vector<16x128xf32>, vector<128x32xf32>, vector<16x32xf32> -> vector<16x32xf32>
    %122 = arith.addf %61, %121 : vector<16x32xf32>
    %123 = vector.broadcast %13 : vector<1x32xf32> to vector<16x32xf32>
    %124 = arith.addf %122, %123 : vector<16x32xf32>
    %c0_49 = arith.constant 0 : index
    %c0_50 = arith.constant 0 : index
    %125 = vector.load %arg2[%c0_49, %c0_50] : memref<16x32xf32, #tpu.memory_space<vmem>>, vector<16x32xf32>
    tpu.vector_store %arg2[%c0_49, %c0_50], %124 {strides = array<i32>} : memref<16x32xf32, #tpu.memory_space<vmem>>, vector<16x32xf32>,
    return
  }
}

</mosaic_0001>

<llo_original>
// kernel: tpu_custom_call.1
$region0: #{tpu_custom_call.1}
  #allocation0 [shape = 'u32[]', space=smem, size = 0x4, offset = 0x4, fixed_abs, tag = 'smem constant byte address 0x4 - core index']
  #allocation1 [shape = 'u32[144,128]{1,0:T(1,128)}', space=vmem, size = 0x12000, scoped, tag = 'internal scratch']
  %s0 = inlined_call_operand.hbm [shape: f32[16,32], index: 0, kind: input, shape index: {}]
  %s1 = inlined_call_operand.hbm [shape: f32[448,128], index: 1, kind: input, shape index: {}]
  %s2 = inlined_call_operand.hbm [shape: f32[16,32], index: 2, kind: output, shape index: {}]
  %s3 = sld [smem:[#allocation0]]
  $region26: #{tpu_custom_call.1} parent=0
    _
  %s5 = ssub.s32 1, %s3
  %s6 = scalar_select 0, %s5, %s3
  $region1: #{tpu_custom_call.1} parent=0
    #allocation2 [shape = 'u8[8192]{0}', space=vmem, size = 0x2000, scoped, tag = 'input window, operand 0, single buffered']
    #allocation3 [shape = 's32[1]{0}', space=sflag, size = 0x4, scoped, tag = 'scoped memory for tpu_custom_call.1']
    #allocation4 [shape = 's32[1]{0}', space=sflag, size = 0x4, scoped, tag = 'scoped memory for tpu_custom_call.1']
    #allocation5 [shape = 'u8[229376]{0}', space=vmem, size = 0x38000, scoped, tag = 'input window, operand 1, single buffered']
    #allocation6 [shape = 's32[1]{0}', space=sflag, size = 0x4, scoped, tag = 'scoped memory for tpu_custom_call.1']
    #allocation7 [shape = 'u8[8192]{0}', space=vmem, size = 0x2000, scoped, tag = 'output window, operand 0, single buffered']
    %7 = vsyncpa [#allocation3], 0
    %8 = vsyncpa [#allocation6], 0
    %9 = vsyncpa [#allocation4], 0
    // Predicated region
    $region2: #{tpu_custom_call.1} parent=1 // pred_check
      _
    $region3: #{tpu_custom_call.1} parent=1 // pred_check_branch
      %11 = sbr.rel (0) target = $region5
    $region4: #{tpu_custom_call.1} parent=1 // pred_region
      %s13 = ssub.s32 256, 256
      %14 = vsyncadd [#allocation3], %s13
      %s15 = sshll.u32 [#allocation2], 4
      %s16 = int_to_ptr.vmem [resolvable:$true] %s15
      %21 = dma.hbm_to_vmem [thread:$0]  %s0, 256, %s16, [#allocation3], 128, 128, 8
    $region5: #{tpu_custom_call.1} parent=1 // pred_fallthru
      _
    // Predicated region
    $region6: #{tpu_custom_call.1} parent=1 // pred_check
      _
    $region7: #{tpu_custom_call.1} parent=1 // pred_check_branch
      %23 = sbr.rel (0) target = $region9
    $region8: #{tpu_custom_call.1} parent=1 // pred_region
      %s25 = ssub.s32 7168, 7168
      %26 = vsyncadd [#allocation6], %s25
      %s27 = sshll.u32 [#allocation5], 4
      %s28 = int_to_ptr.vmem [resolvable:$true] %s27
      %33 = dma.hbm_to_vmem [thread:$0]  %s1, 7168, %s28, [#allocation6], 128, 128, 8
    $region9: #{tpu_custom_call.1} parent=1 // pred_fallthru
      _
    // Predicated region
    $region10: #{tpu_custom_call.1} parent=1 // pred_check
      _
    $region11: #{tpu_custom_call.1} parent=1 // pred_check_branch
      %35 = sbr.rel (0) target = $region13
    $region12: #{tpu_custom_call.1} parent=1 // pred_region
      %36 = dma.done [#allocation3], 256
    $region13: #{tpu_custom_call.1} parent=1 // pred_fallthru
      _
    // Predicated region
    $region14: #{tpu_custom_call.1} parent=1 // pred_check
      _
    $region15: #{tpu_custom_call.1} parent=1 // pred_check_branch
      %38 = sbr.rel (0) target = $region17
    $region16: #{tpu_custom_call.1} parent=1 // pred_region
      %39 = dma.done [#allocation6], 7168
    $region17: #{tpu_custom_call.1} parent=1 // pred_fallthru
      _
    %v40 = vld [vmem:[#allocation2] sm:$0xff]
    %v41 = vld [vmem:[#allocation2 + $0x8] sm:$0xff]
    %v42 = vld [vmem:[#allocation5] sm:$0xff]
    %v43 = vld [vmem:[#allocation5 + $0x8] sm:$0xff]
    %v44 = vld [vmem:[#allocation5 + $0x10] sm:$0xff]
    %v45 = vld [vmem:[#allocation5 + $0x18] sm:$0xff]
    %v46 = vld [vmem:[#allocation5 + $0x20] sm:$0xff]
    %v47 = vld [vmem:[#allocation5 + $0x28] sm:$0xff]
    %v48 = vld [vmem:[#allocation5 + $0x30] sm:$0xff]
    %v49 = vld [vmem:[#allocation5 + $0x38] sm:$0xff]
    %v50 = vld [vmem:[#allocation5 + $0x40] sm:$0xff]
    %v51 = vld [vmem:[#allocation5 + $0x48] sm:$0xff]
    %v52 = vld [vmem:[#allocation5 + $0x50] sm:$0xff]
    %v53 = vld [vmem:[#allocation5 + $0x58] sm:$0xff]
    %v54 = vld [vmem:[#allocation5 + $0x60] sm:$0xff]
    %v55 = vld [vmem:[#allocation5 + $0x68] sm:$0xff]
    %v56 = vld [vmem:[#allocation5 + $0x70] sm:$0xff]
    %v57 = vld [vmem:[#allocation5 + $0x78] sm:$0xff]
    %v58 = vld [vmem:[#allocation5 + $0x80] sm:$0xff]
    %v59 = vld [vmem:[#allocation5 + $0x88] sm:$0xff]
    %v60 = vld [vmem:[#allocation5 + $0x90] sm:$0xff]
    %v61 = vld [vmem:[#allocation5 + $0x98] sm:$0xff]
    %v62 = vld [vmem:[#allocation5 + $0xa0] sm:$0xff]
    %v63 = vld [vmem:[#allocation5 + $0xa8] sm:$0xff]
    %v64 = vld [vmem:[#allocation5 + $0xb0] sm:$0xff]
    %v65 = vld [vmem:[#allocation5 + $0xb8] sm:$0xff]
    %v66 = vld [vmem:[#allocation5 + $0xc0] sm:$0xff]
    %v67 = vld [vmem:[#allocation5 + $0xc8] sm:$0xff]
    %v68 = vld [vmem:[#allocation5 + $0xd0] sm:$0xff]
    %v69 = vld [vmem:[#allocation5 + $0xd8] sm:$0xff]
    %v70 = vld [vmem:[#allocation5 + $0xe0] sm:$0xff]
    %v71 = vld [vmem:[#allocation5 + $0xe8] sm:$0xff]
    %v72 = vld [vmem:[#allocation5 + $0xf0] sm:$0xff]
    %v73 = vld [vmem:[#allocation5 + $0xf8] sm:$0xff]
    %v74 = vld [vmem:[#allocation5 + $0x100] sm:$0xff]
    %v75 = vld [vmem:[#allocation5 + $0x108] sm:$0xff]
    %v76 = vld [vmem:[#allocation5 + $0x110] sm:$0xff]
    %v77 = vld [vmem:[#allocation5 + $0x118] sm:$0xff]
    %v78 = vld [vmem:[#allocation5 + $0x120] sm:$0xff]
    %v79 = vld [vmem:[#allocation5 + $0x128] sm:$0xff]
    %v80 = vld [vmem:[#allocation5 + $0x130] sm:$0xff]
    %v81 = vld [vmem:[#allocation5 + $0x138] sm:$0xff]
    %v82 = vld [vmem:[#allocation5 + $0x140] sm:$0xff]
    %v83 = vld [vmem:[#allocation5 + $0x148] sm:$0xff]
    %v84 = vld [vmem:[#allocation5 + $0x150] sm:$0xff]
    %v85 = vld [vmem:[#allocation5 + $0x158] sm:$0xff]
    %v86 = vld [vmem:[#allocation5 + $0x160] sm:$0xff]
    %v87 = vld [vmem:[#allocation5 + $0x168] sm:$0xff]
    %v88 = vld [vmem:[#allocation5 + $0x170] sm:$0xff]
    %v89 = vld [vmem:[#allocation5 + $0x178] sm:$0xff]
    %v90 = vld [vmem:[#allocation5 + $0x180] sm:$0xff]
    %v91 = vld [vmem:[#allocation5 + $0x188] sm:$0xff]
    %v92 = vld [vmem:[#allocation5 + $0x190] sm:$0xff]
    %v93 = vld [vmem:[#allocation5 + $0x198] sm:$0xff]
    %v94 = vld [vmem:[#allocation5 + $0x1a0] sm:$0x1]
    %v95 = vld [vmem:[#allocation5 + $0x1a8] sm:$0x1]
    %v96 = vld [vmem:[#allocation5 + $0x1b0] sm:$0x1]
    %v97 = vld [vmem:[#allocation5 + $0x1b8] sm:$0x1]
    %vm98 = vcmask 261120
    %v99 = vsel %vm98, %v40, 0.0
    %100 = vadd.xlane.f32.xlu0 %v99
    %v101 = vpop.xlane.xlu0 %100
    %v102 = vsel %vm98, %v41, 0.0
    %103 = vadd.xlane.f32.xlu0 %v102
    %v104 = vpop.xlane.xlu0 %103
    %v105 = vrcp.pop 32.0
    %v106 = vmul.f32 %v101, %v105
    %v107 = vmul.f32 %v104, %v105
    %v108 = vsub.f32 %v40, %v106
    %v109 = vsub.f32 %v41, %v107
    %v110 = vmul.f32 %v108, %v108
    %v111 = vmul.f32 %v109, %v109
    %v112 = vsel %vm98, %v110, 0.0
    %113 = vadd.xlane.f32.xlu0 %v112
    %v114 = vpop.xlane.xlu0 %113
    %v115 = vsel %vm98, %v111, 0.0
    %116 = vadd.xlane.f32.xlu0 %v115
    %v117 = vpop.xlane.xlu0 %116
    %v118 = vmul.f32 %v114, %v105
    %v119 = vmul.f32 %v117, %v105
    %v120 = vadd.f32 %v118, 1e-05
    %v121 = vadd.f32 %v119, 1e-05
    %v122 = vrsqrt.pop %v120
    %v123 = vrsqrt.pop %v121
    %v124 = vmul.f32 %v108, %v122
    %v125 = vmul.f32 %v109, %v123
    %v126 = vlaneseq
    %v127 = vshrl.u32 %v126, 7
    %v128 = vsub.s32 0, %v127
    %v129 = vrot.slane %v94, %v128
    %v131 = vsel %vm98, %v124, 0
    %v134 = vsel %vm98, %v125, 0
    %136 = vmatprep.subr.mxu0 0.0
    %137 = vmatpush1.msra.mxu0 %v42
    %138 = vmatprep.subr.mxu0 0.0
    %139 = vmatpush1.msra.mxu0 %v43
    %140 = vmatprep.subr.mxu0 0.0
    %141 = vmatpush1.msra.mxu0 %v44
    %142 = vmatprep.subr.mxu0 0.0
    %143 = vmatpush1.msra.mxu0 %v45
    %144 = vmatprep.subr.mxu0 0.0
    %145 = vmatpush1.msra.mxu0 0.0
    %146 = vmatprep.subr.mxu0 0.0
    %147 = vmatpush1.msra.mxu0 0.0
    %148 = vmatprep.subr.mxu0 0.0
    %149 = vmatpush1.msra.mxu0 0.0
    %150 = vmatprep.subr.mxu0 0.0
    %151 = vmatpush1.msra.mxu0 0.0
    %152 = vmatprep.subr.mxu0 0.0
    %153 = vmatpush1.msra.mxu0 0.0
    %154 = vmatprep.subr.mxu0 0.0
    %155 = vmatpush1.msra.mxu0 0.0
    %156 = vmatprep.subr.mxu0 0.0
    %157 = vmatpush1.msra.mxu0 0.0
    %158 = vmatprep.subr.mxu0 0.0
    %159 = vmatpush1.msra.mxu0 0.0
    %160 = vmatprep.subr.mxu0 0.0
    %161 = vmatpush1.msra.mxu0 0.0
    %162 = vmatprep.subr.mxu0 0.0
    %163 = vmatpush1.msra.mxu0 0.0
    %164 = vmatprep.subr.mxu0 0.0
    %165 = vmatpush1.msra.mxu0 0.0
    %166 = vmatprep.subr.mxu0 0.0
    %167 = vmatpush1.msra.mxu0 0.0
    %168 = vmatprep.subr.mxu0 0.0
    %169 = vmatpush1.msra.mxu0 0.0
    %170 = vmatprep.subr.mxu0 0.0
    %171 = vmatpush1.msra.mxu0 0.0
    %172 = vmatprep.subr.mxu0 0.0
    %173 = vmatpush1.msra.mxu0 0.0
    %174 = vmatprep.subr.mxu0 0.0
    %175 = vmatpush1.msra.mxu0 0.0
    %176 = vmatprep.subr.mxu0 0.0
    %177 = vmatpush1.msra.mxu0 0.0
    %178 = vmatprep.subr.mxu0 0.0
    %179 = vmatpush1.msra.mxu0 0.0
    %180 = vmatprep.subr.mxu0 0.0
    %181 = vmatpush1.msra.mxu0 0.0
    %182 = vmatprep.subr.mxu0 0.0
    %183 = vmatpush1.msra.mxu0 0.0
    %184 = vmatprep.subr.mxu0 0.0
    %185 = vmatpush1.msra.mxu0 0.0
    %186 = vmatprep.subr.mxu0 0.0
    %187 = vmatpush1.msra.mxu0 0.0
    %188 = vmatprep.subr.mxu0 0.0
    %189 = vmatpush1.msra.mxu0 0.0
    %190 = vmatprep.subr.mxu0 0.0
    %191 = vmatpush1.msra.mxu0 0.0
    %192 = vmatprep.subr.mxu0 0.0
    %193 = vmatpush1.msra.mxu0 0.0
    %194 = vmatprep.subr.mxu0 0.0
    %195 = vmatpush1.msra.mxu0 0.0
    %196 = vmatprep.subr.mxu0 0.0
    %197 = vmatpush1.msra.mxu0 0.0
    %198 = vmatprep.subr.mxu0 0.0
    %199 = vmatpush1.msra.mxu0 0.0
    %200 = vmatprep.mubr.f32.mxu0 0.0
    %201 = vmatmul.mubr.f32.gmra.mrb[0].mxu0 %v131
    %v202 = vpop.f32.mrb[0].mxu0
    %v203 = vadd.f32 %v129, %v202
    %v204 = vpop.f32.mrb[0].mxu0
    %205 = vmatprep.mubr.f32.mxu0 0.0
    %206 = vmatmul.mubr.f32.gmra.mrb[0].mxu0 %v134
    %v207 = vpop.f32.mrb[0].mxu0
    %v208 = vadd.f32 %v129, %v207
    %v209 = vpop.f32.mrb[0].mxu0
    %210 = vdwg.mxu0
    %213 = vrot.lane.b32.xlu0 %v203, 96
    %v214 = vpop.permute.xlu0 %213
    %215 = vrot.lane.b32.xlu0 %v208, 96
    %v216 = vpop.permute.xlu0 %215
    %217 = vrot.lane.b32.xlu0 %v214, 96
    %v218 = vpop.permute.xlu0 %217
    %219 = vrot.lane.b32.xlu0 %v216, 96
    %v220 = vpop.permute.xlu0 %219
    %v226 = vsel %vm98, %v70, 0
    %v229 = vsel %vm98, %v71, 0
    %v232 = vsel %vm98, %v72, 0
    %v235 = vsel %vm98, %v73, 0
    %v238 = vsel %vm98, %v74, 0
    %v241 = vsel %vm98, %v75, 0
    %v244 = vsel %vm98, %v76, 0
    %v247 = vsel %vm98, %v77, 0
    %249 = vmatprep.subr.mxu0 0.0
    %250 = vmatpush1.msra.mxu0 %v214
    %251 = vmatprep.subr.mxu0 0.0
    %252 = vmatpush1.msra.mxu0 %v216
    %253 = vmatprep.subr.mxu0 0.0
    %254 = vmatpush1.msra.mxu0 %v218
    %255 = vmatprep.subr.mxu0 0.0
    %256 = vmatpush1.msra.mxu0 %v220
    %257 = vmatprep.subr.mxu0 0.0
    %258 = vmatpush1.msra.mxu0 0.0
    %259 = vmatprep.subr.mxu0 0.0
    %260 = vmatpush1.msra.mxu0 0.0
    %261 = vmatprep.subr.mxu0 0.0
    %262 = vmatpush1.msra.mxu0 0.0
    %263 = vmatprep.subr.mxu0 0.0
    %264 = vmatpush1.msra.mxu0 0.0
    %265 = vmatprep.subr.mxu0 0.0
    %266 = vmatpush1.msra.mxu0 0.0
    %267 = vmatprep.subr.mxu0 0.0
    %268 = vmatpush1.msra.mxu0 0.0
    %269 = vmatprep.subr.mxu0 0.0
    %270 = vmatpush1.msra.mxu0 0.0
    %271 = vmatprep.subr.mxu0 0.0
    %272 = vmatpush1.msra.mxu0 0.0
    %273 = vmatprep.subr.mxu0 0.0
    %274 = vmatpush1.msra.mxu0 0.0
    %275 = vmatprep.subr.mxu0 0.0
    %276 = vmatpush1.msra.mxu0 0.0
    %277 = vmatprep.subr.mxu0 0.0
    %278 = vmatpush1.msra.mxu0 0.0
    %279 = vmatprep.subr.mxu0 0.0
    %280 = vmatpush1.msra.mxu0 0.0
    %281 = vmatprep.subr.mxu0 0.0
    %282 = vmatpush1.msra.mxu0 0.0
    %283 = vmatprep.subr.mxu0 0.0
    %284 = vmatpush1.msra.mxu0 0.0
    %285 = vmatprep.subr.mxu0 0.0
    %286 = vmatpush1.msra.mxu0 0.0
    %287 = vmatprep.subr.mxu0 0.0
    %288 = vmatpush1.msra.mxu0 0.0
    %289 = vmatprep.subr.mxu0 0.0
    %290 = vmatpush1.msra.mxu0 0.0
    %291 = vmatprep.subr.mxu0 0.0
    %292 = vmatpush1.msra.mxu0 0.0
    %293 = vmatprep.subr.mxu0 0.0
    %294 = vmatpush1.msra.mxu0 0.0
    %295 = vmatprep.subr.mxu0 0.0
    %296 = vmatpush1.msra.mxu0 0.0
    %297 = vmatprep.subr.mxu0 0.0
    %298 = vmatpush1.msra.mxu0 0.0
    %299 = vmatprep.subr.mxu0 0.0
    %300 = vmatpush1.msra.mxu0 0.0
    %301 = vmatprep.subr.mxu0 0.0
    %302 = vmatpush1.msra.mxu0 0.0
    %303 = vmatprep.subr.mxu0 0.0
    %304 = vmatpush1.msra.mxu0 0.0
    %305 = vmatprep.subr.mxu0 0.0
    %306 = vmatpush1.msra.mxu0 0.0
    %307 = vmatprep.subr.mxu0 0.0
    %308 = vmatpush1.msra.mxu0 0.0
    %309 = vmatprep.subr.mxu0 0.0
    %310 = vmatpush1.msra.mxu0 0.0
    %311 = vmatprep.subr.mxu0 0.0
    %312 = vmatpush1.msra.mxu0 0.0
    %313 = vmatprep.mubr.f32.mxu0 0.0
    %314 = vmatmul.mubr.f32.gmra.mrb[0].mxu0 %v226
    %v315 = vpop.f32.mrb[0].mxu0
    %v316 = vadd.f32 0.0, %v315
    %v317 = vpop.f32.mrb[0].mxu0
    %318 = vmatprep.mubr.f32.mxu0 0.0
    %319 = vmatmul.mubr.f32.gmra.mrb[0].mxu0 %v229
    %v320 = vpop.f32.mrb[0].mxu0
    %v321 = vadd.f32 0.0, %v320
    %v322 = vpop.f32.mrb[0].mxu0
    %323 = vmatprep.mubr.f32.mxu0 0.0
    %324 = vmatmul.mubr.f32.gmra.mrb[0].mxu0 %v232
    %v325 = vpop.f32.mrb[0].mxu0
    %v326 = vadd.f32 0.0, %v325
    %v327 = vpop.f32.mrb[0].mxu0
    %328 = vmatprep.mubr.f32.mxu0 0.0
    %329 = vmatmul.mubr.f32.gmra.mrb[0].mxu0 %v235
    %v330 = vpop.f32.mrb[0].mxu0
    %v331 = vadd.f32 0.0, %v330
    %v332 = vpop.f32.mrb[0].mxu0
    %333 = vmatprep.mubr.f32.mxu0 0.0
    %334 = vmatmul.mubr.f32.gmra.mrb[0].mxu0 %v238
    %v335 = vpop.f32.mrb[0].mxu0
    %v336 = vadd.f32 0.0, %v335
    %v337 = vpop.f32.mrb[0].mxu0
    %338 = vmatprep.mubr.f32.mxu0 0.0
    %339 = vmatmul.mubr.f32.gmra.mrb[0].mxu0 %v241
    %v340 = vpop.f32.mrb[0].mxu0
    %v341 = vadd.f32 0.0, %v340
    %v342 = vpop.f32.mrb[0].mxu0
    %343 = vmatprep.mubr.f32.mxu0 0.0
    %344 = vmatmul.mubr.f32.gmra.mrb[0].mxu0 %v244
    %v345 = vpop.f32.mrb[0].mxu0
    %v346 = vadd.f32 0.0, %v345
    %v347 = vpop.f32.mrb[0].mxu0
    %348 = vmatprep.mubr.f32.mxu0 0.0
    %349 = vmatmul.mubr.f32.gmra.mrb[0].mxu0 %v247
    %v350 = vpop.f32.mrb[0].mxu0
    %v351 = vadd.f32 0.0, %v350
    %v352 = vpop.f32.mrb[0].mxu0
    %353 = vdwg.mxu0
    %v354 = vmul.f32 %v316, %v78
    %v355 = vmul.f32 %v321, %v79
    %v356 = vmul.f32 %v326, %v80
    %v357 = vmul.f32 %v331, %v81
    %v358 = vmul.f32 %v336, %v82
    %v359 = vmul.f32 %v341, %v83
    %v360 = vmul.f32 %v346, %v84
    %v361 = vmul.f32 %v351, %v85
    %v362 = vsel %vm98, %v203, 0
    %v364 = vsel %vm98, %v208, 0
    %v367 = vsel %vm98, %v354, 0
    %v370 = vsel %vm98, %v355, 0
    %v373 = vsel %vm98, %v356, 0
    %v376 = vsel %vm98, %v357, 0
    %378 = vmatprep.subr.mxu0 0.0
    %379 = vmatpush1.xpose.msra.mxu0 %v367
    %380 = vmatprep.subr.mxu0 0.0
    %381 = vmatpush1.xpose.msra.mxu0 %v370
    %382 = vmatprep.subr.mxu0 0.0
    %383 = vmatpush1.xpose.msra.mxu0 %v373
    %384 = vmatprep.subr.mxu0 0.0
    %385 = vmatpush1.xpose.msra.mxu0 %v376
    %386 = vmatprep.subr.mxu0 0.0
    %387 = vmatpush1.xpose.msra.mxu0 0.0
    %388 = vmatprep.subr.mxu0 0.0
    %389 = vmatpush1.xpose.msra.mxu0 0.0
    %390 = vmatprep.subr.mxu0 0.0
    %391 = vmatpush1.xpose.msra.mxu0 0.0
    %392 = vmatprep.subr.mxu0 0.0
    %393 = vmatpush1.xpose.msra.mxu0 0.0
    %394 = vmatprep.subr.mxu0 0.0
    %395 = vmatpush1.xpose.msra.mxu0 0.0
    %396 = vmatprep.subr.mxu0 0.0
    %397 = vmatpush1.xpose.msra.mxu0 0.0
    %398 = vmatprep.subr.mxu0 0.0
    %399 = vmatpush1.xpose.msra.mxu0 0.0
    %400 = vmatprep.subr.mxu0 0.0
    %401 = vmatpush1.xpose.msra.mxu0 0.0
    %402 = vmatprep.subr.mxu0 0.0
    %403 = vmatpush1.xpose.msra.mxu0 0.0
    %404 = vmatprep.subr.mxu0 0.0
    %405 = vmatpush1.xpose.msra.mxu0 0.0
    %406 = vmatprep.subr.mxu0 0.0
    %407 = vmatpush1.xpose.msra.mxu0 0.0
    %408 = vmatprep.subr.mxu0 0.0
    %409 = vmatpush1.xpose.msra.mxu0 0.0
    %410 = vmatprep.subr.mxu0 0.0
    %411 = vmatpush1.xpose.msra.mxu0 0.0
    %412 = vmatprep.subr.mxu0 0.0
    %413 = vmatpush1.xpose.msra.mxu0 0.0
    %414 = vmatprep.subr.mxu0 0.0
    %415 = vmatpush1.xpose.msra.mxu0 0.0
    %416 = vmatprep.subr.mxu0 0.0
    %417 = vmatpush1.xpose.msra.mxu0 0.0
    %418 = vmatprep.subr.mxu0 0.0
    %419 = vmatpush1.xpose.msra.mxu0 0.0
    %420 = vmatprep.subr.mxu0 0.0
    %421 = vmatpush1.xpose.msra.mxu0 0.0
    %422 = vmatprep.subr.mxu0 0.0
    %423 = vmatpush1.xpose.msra.mxu0 0.0
    %424 = vmatprep.subr.mxu0 0.0
    %425 = vmatpush1.xpose.msra.mxu0 0.0
    %426 = vmatprep.subr.mxu0 0.0
    %427 = vmatpush1.xpose.msra.mxu0 0.0
    %428 = vmatprep.subr.mxu0 0.0
    %429 = vmatpush1.xpose.msra.mxu0 0.0
    %430 = vmatprep.subr.mxu0 0.0
    %431 = vmatpush1.xpose.msra.mxu0 0.0
    %432 = vmatprep.subr.mxu0 0.0
    %433 = vmatpush1.xpose.msra.mxu0 0.0
    %434 = vmatprep.subr.mxu0 0.0
    %435 = vmatpush1.xpose.msra.mxu0 0.0
    %436 = vmatprep.subr.mxu0 0.0
    %437 = vmatpush1.xpose.msra.mxu0 0.0
    %438 = vmatprep.subr.mxu0 0.0
    %439 = vmatpush1.xpose.msra.mxu0 0.0
    %440 = vmatprep.subr.mxu0 0.0
    %441 = vmatpush1.xpose.msra.mxu0 0.0
    %442 = vmatprep.mubr.f32.mxu0 0.0
    %443 = vmatmul.mubr.f32.gmra.mrb[0].mxu0 %v362
    %v444 = vpop.f32.mrb[0].mxu0
    %v445 = vadd.f32 %v92, %v444
    %v446 = vpop.f32.mrb[0].mxu0
    %447 = vmatprep.mubr.f32.mxu0 0.0
    %448 = vmatmul.mubr.f32.gmra.mrb[0].mxu0 %v364
    %v449 = vpop.f32.mrb[0].mxu0
    %v450 = vadd.f32 %v93, %v449
    %v451 = vpop.f32.mrb[0].mxu0
    %452 = vdwg.mxu0
    %v453 = vsel %vm98, %v445, -inf
    %454 = vmax.xlane.f32.xlu0 %v453
    %v455 = vpop.xlane.xlu0 %454
    %v456 = vsel %vm98, %v450, -inf
    %457 = vmax.xlane.f32.xlu0 %v456
    %v458 = vpop.xlane.xlu0 %457
    %v459 = vsub.f32 %v445, %v455
    %v460 = vsub.f32 %v450, %v458
    %v461 = vmul.f32 %v459, 1.442695
    %v462 = vpow.pop %v461
    %v463 = vmul.f32 %v460, 1.442695
    %v464 = vpow.pop %v463
    %v465 = vmul.f32 %v462, %v90
    %v466 = vmul.f32 %v464, %v91
    %v468 = vsel %vm98, %v465, 0
    %v471 = vsel %vm98, %v466, 0
    %473 = vmatprep.subr.mxu0 0.0
    %474 = vmatpush1.msra.mxu0 %v86
    %475 = vmatprep.subr.mxu0 0.0
    %476 = vmatpush1.msra.mxu0 %v87
    %477 = vmatprep.subr.mxu0 0.0
    %478 = vmatpush1.msra.mxu0 %v88
    %479 = vmatprep.subr.mxu0 0.0
    %480 = vmatpush1.msra.mxu0 %v89
    %481 = vmatprep.subr.mxu0 0.0
    %482 = vmatpush1.msra.mxu0 0.0
    %483 = vmatprep.subr.mxu0 0.0
    %484 = vmatpush1.msra.mxu0 0.0
    %485 = vmatprep.subr.mxu0 0.0
    %486 = vmatpush1.msra.mxu0 0.0
    %487 = vmatprep.subr.mxu0 0.0
    %488 = vmatpush1.msra.mxu0 0.0
    %489 = vmatprep.subr.mxu0 0.0
    %490 = vmatpush1.msra.mxu0 0.0
    %491 = vmatprep.subr.mxu0 0.0
    %492 = vmatpush1.msra.mxu0 0.0
    %493 = vmatprep.subr.mxu0 0.0
    %494 = vmatpush1.msra.mxu0 0.0
    %495 = vmatprep.subr.mxu0 0.0
    %496 = vmatpush1.msra.mxu0 0.0
    %497 = vmatprep.subr.mxu0 0.0
    %498 = vmatpush1.msra.mxu0 0.0
    %499 = vmatprep.subr.mxu0 0.0
    %500 = vmatpush1.msra.mxu0 0.0
    %501 = vmatprep.subr.mxu0 0.0
    %502 = vmatpush1.msra.mxu0 0.0
    %503 = vmatprep.subr.mxu0 0.0
    %504 = vmatpush1.msra.mxu0 0.0
    %505 = vmatprep.subr.mxu0 0.0
    %506 = vmatpush1.msra.mxu0 0.0
    %507 = vmatprep.subr.mxu0 0.0
    %508 = vmatpush1.msra.mxu0 0.0
    %509 = vmatprep.subr.mxu0 0.0
    %510 = vmatpush1.msra.mxu0 0.0
    %511 = vmatprep.subr.mxu0 0.0
    %512 = vmatpush1.msra.mxu0 0.0
    %513 = vmatprep.subr.mxu0 0.0
    %514 = vmatpush1.msra.mxu0 0.0
    %515 = vmatprep.subr.mxu0 0.0
    %516 = vmatpush1.msra.mxu0 0.0
    %517 = vmatprep.subr.mxu0 0.0
    %518 = vmatpush1.msra.mxu0 0.0
    %519 = vmatprep.subr.mxu0 0.0
    %520 = vmatpush1.msra.mxu0 0.0
    %521 = vmatprep.subr.mxu0 0.0
    %522 = vmatpush1.msra.mxu0 0.0
    %523 = vmatprep.subr.mxu0 0.0
    %524 = vmatpush1.msra.mxu0 0.0
    %525 = vmatprep.subr.mxu0 0.0
    %526 = vmatpush1.msra.mxu0 0.0
    %527 = vmatprep.subr.mxu0 0.0
    %528 = vmatpush1.msra.mxu0 0.0
    %529 = vmatprep.subr.mxu0 0.0
    %530 = vmatpush1.msra.mxu0 0.0
    %531 = vmatprep.subr.mxu0 0.0
    %532 = vmatpush1.msra.mxu0 0.0
    %533 = vmatprep.subr.mxu0 0.0
    %534 = vmatpush1.msra.mxu0 0.0
    %535 = vmatprep.subr.mxu0 0.0
    %536 = vmatpush1.msra.mxu0 0.0
    %537 = vmatprep.mubr.f32.mxu0 0.0
    %538 = vmatmul.mubr.f32.gmra.mrb[0].mxu0 %v468
    %v539 = vpop.f32.mrb[0].mxu0
    %v540 = vadd.f32 0.0, %v539
    %v541 = vpop.f32.mrb[0].mxu0
    %542 = vmatprep.mubr.f32.mxu0 0.0
    %543 = vmatmul.mubr.f32.gmra.mrb[0].mxu0 %v471
    %v544 = vpop.f32.mrb[0].mxu0
    %v545 = vadd.f32 0.0, %v544
    %v546 = vpop.f32.mrb[0].mxu0
    %547 = vdwg.mxu0
    %v548 = vrcp.pop %v540
    %v549 = vrcp.pop %v545
    %v550 = vmul.f32 %v540, %v548
    %v551 = vmul.f32 %v545, %v549
    %v552 = vsub.f32 2.0, %v550
    %v553 = vsub.f32 2.0, %v551
    %v554 = vmul.f32 %v548, %v552
    %v555 = vmul.f32 %v549, %v553
    %v556 = vmul.f32 %v465, %v554
    %v557 = vmul.f32 %v466, %v555
    %v559 = vsel %vm98, %v556, 0
    %v562 = vsel %vm98, %v557, 0
    %564 = vmatprep.subr.mxu0 0.0
    %565 = vmatpush1.msra.mxu0 %v358
    %566 = vmatprep.subr.mxu0 0.0
    %567 = vmatpush1.msra.mxu0 %v359
    %568 = vmatprep.subr.mxu0 0.0
    %569 = vmatpush1.msra.mxu0 %v360
    %570 = vmatprep.subr.mxu0 0.0
    %571 = vmatpush1.msra.mxu0 %v361
    %572 = vmatprep.subr.mxu0 0.0
    %573 = vmatpush1.msra.mxu0 0.0
    %574 = vmatprep.subr.mxu0 0.0
    %575 = vmatpush1.msra.mxu0 0.0
    %576 = vmatprep.subr.mxu0 0.0
    %577 = vmatpush1.msra.mxu0 0.0
    %578 = vmatprep.subr.mxu0 0.0
    %579 = vmatpush1.msra.mxu0 0.0
    %580 = vmatprep.subr.mxu0 0.0
    %581 = vmatpush1.msra.mxu0 0.0
    %582 = vmatprep.subr.mxu0 0.0
    %583 = vmatpush1.msra.mxu0 0.0
    %584 = vmatprep.subr.mxu0 0.0
    %585 = vmatpush1.msra.mxu0 0.0
    %586 = vmatprep.subr.mxu0 0.0
    %587 = vmatpush1.msra.mxu0 0.0
    %588 = vmatprep.subr.mxu0 0.0
    %589 = vmatpush1.msra.mxu0 0.0
    %590 = vmatprep.subr.mxu0 0.0
    %591 = vmatpush1.msra.mxu0 0.0
    %592 = vmatprep.subr.mxu0 0.0
    %593 = vmatpush1.msra.mxu0 0.0
    %594 = vmatprep.subr.mxu0 0.0
    %595 = vmatpush1.msra.mxu0 0.0
    %596 = vmatprep.subr.mxu0 0.0
    %597 = vmatpush1.msra.mxu0 0.0
    %598 = vmatprep.subr.mxu0 0.0
    %599 = vmatpush1.msra.mxu0 0.0
    %600 = vmatprep.subr.mxu0 0.0
    %601 = vmatpush1.msra.mxu0 0.0
    %602 = vmatprep.subr.mxu0 0.0
    %603 = vmatpush1.msra.mxu0 0.0
    %604 = vmatprep.subr.mxu0 0.0
    %605 = vmatpush1.msra.mxu0 0.0
    %606 = vmatprep.subr.mxu0 0.0
    %607 = vmatpush1.msra.mxu0 0.0
    %608 = vmatprep.subr.mxu0 0.0
    %609 = vmatpush1.msra.mxu0 0.0
    %610 = vmatprep.subr.mxu0 0.0
    %611 = vmatpush1.msra.mxu0 0.0
    %612 = vmatprep.subr.mxu0 0.0
    %613 = vmatpush1.msra.mxu0 0.0
    %614 = vmatprep.subr.mxu0 0.0
    %615 = vmatpush1.msra.mxu0 0.0
    %616 = vmatprep.subr.mxu0 0.0
    %617 = vmatpush1.msra.mxu0 0.0
    %618 = vmatprep.subr.mxu0 0.0
    %619 = vmatpush1.msra.mxu0 0.0
    %620 = vmatprep.subr.mxu0 0.0
    %621 = vmatpush1.msra.mxu0 0.0
    %622 = vmatprep.subr.mxu0 0.0
    %623 = vmatpush1.msra.mxu0 0.0
    %624 = vmatprep.subr.mxu0 0.0
    %625 = vmatpush1.msra.mxu0 0.0
    %626 = vmatprep.subr.mxu0 0.0
    %627 = vmatpush1.msra.mxu0 0.0
    %628 = vmatprep.mubr.f32.mxu0 0.0
    %629 = vmatmul.mubr.f32.gmra.mrb[0].mxu0 %v559
    %v630 = vpop.f32.mrb[0].mxu0
    %v631 = vadd.f32 0.0, %v630
    %v632 = vpop.f32.mrb[0].mxu0
    %633 = vmatprep.mubr.f32.mxu0 0.0
    %634 = vmatmul.mubr.f32.gmra.mrb[0].mxu0 %v562
    %v635 = vpop.f32.mrb[0].mxu0
    %v636 = vadd.f32 0.0, %v635
    %v637 = vpop.f32.mrb[0].mxu0
    %638 = vdwg.mxu0
    %v640 = vsel %vm98, %v631, 0
    %v643 = vsel %vm98, %v636, 0
    %645 = vmatprep.subr.mxu0 0.0
    %646 = vmatpush1.msra.mxu0 %v66
    %647 = vmatprep.subr.mxu0 0.0
    %648 = vmatpush1.msra.mxu0 %v67
    %649 = vmatprep.subr.mxu0 0.0
    %650 = vmatpush1.msra.mxu0 %v68
    %651 = vmatprep.subr.mxu0 0.0
    %652 = vmatpush1.msra.mxu0 %v69
    %653 = vmatprep.subr.mxu0 0.0
    %654 = vmatpush1.msra.mxu0 0.0
    %655 = vmatprep.subr.mxu0 0.0
    %656 = vmatpush1.msra.mxu0 0.0
    %657 = vmatprep.subr.mxu0 0.0
    %658 = vmatpush1.msra.mxu0 0.0
    %659 = vmatprep.subr.mxu0 0.0
    %660 = vmatpush1.msra.mxu0 0.0
    %661 = vmatprep.subr.mxu0 0.0
    %662 = vmatpush1.msra.mxu0 0.0
    %663 = vmatprep.subr.mxu0 0.0
    %664 = vmatpush1.msra.mxu0 0.0
    %665 = vmatprep.subr.mxu0 0.0
    %666 = vmatpush1.msra.mxu0 0.0
    %667 = vmatprep.subr.mxu0 0.0
    %668 = vmatpush1.msra.mxu0 0.0
    %669 = vmatprep.subr.mxu0 0.0
    %670 = vmatpush1.msra.mxu0 0.0
    %671 = vmatprep.subr.mxu0 0.0
    %672 = vmatpush1.msra.mxu0 0.0
    %673 = vmatprep.subr.mxu0 0.0
    %674 = vmatpush1.msra.mxu0 0.0
    %675 = vmatprep.subr.mxu0 0.0
    %676 = vmatpush1.msra.mxu0 0.0
    %677 = vmatprep.subr.mxu0 0.0
    %678 = vmatpush1.msra.mxu0 0.0
    %679 = vmatprep.subr.mxu0 0.0
    %680 = vmatpush1.msra.mxu0 0.0
    %681 = vmatprep.subr.mxu0 0.0
    %682 = vmatpush1.msra.mxu0 0.0
    %683 = vmatprep.subr.mxu0 0.0
    %684 = vmatpush1.msra.mxu0 0.0
    %685 = vmatprep.subr.mxu0 0.0
    %686 = vmatpush1.msra.mxu0 0.0
    %687 = vmatprep.subr.mxu0 0.0
    %688 = vmatpush1.msra.mxu0 0.0
    %689 = vmatprep.subr.mxu0 0.0
    %690 = vmatpush1.msra.mxu0 0.0
    %691 = vmatprep.subr.mxu0 0.0
    %692 = vmatpush1.msra.mxu0 0.0
    %693 = vmatprep.subr.mxu0 0.0
    %694 = vmatpush1.msra.mxu0 0.0
    %695 = vmatprep.subr.mxu0 0.0
    %696 = vmatpush1.msra.mxu0 0.0
    %697 = vmatprep.subr.mxu0 0.0
    %698 = vmatpush1.msra.mxu0 0.0
    %699 = vmatprep.subr.mxu0 0.0
    %700 = vmatpush1.msra.mxu0 0.0
    %701 = vmatprep.subr.mxu0 0.0
    %702 = vmatpush1.msra.mxu0 0.0
    %703 = vmatprep.subr.mxu0 0.0
    %704 = vmatpush1.msra.mxu0 0.0
    %705 = vmatprep.subr.mxu0 0.0
    %706 = vmatpush1.msra.mxu0 0.0
    %707 = vmatprep.subr.mxu0 0.0
    %708 = vmatpush1.msra.mxu0 0.0
    %709 = vmatprep.mubr.f32.mxu0 0.0
    %710 = vmatmul.mubr.f32.gmra.mrb[0].mxu0 %v640
    %v711 = vpop.f32.mrb[0].mxu0
    %v712 = vadd.f32 0.0, %v711
    %v713 = vpop.f32.mrb[0].mxu0
    %714 = vmatprep.mubr.f32.mxu0 0.0
    %715 = vmatmul.mubr.f32.gmra.mrb[0].mxu0 %v643
    %v716 = vpop.f32.mrb[0].mxu0
    %v717 = vadd.f32 0.0, %v716
    %v718 = vpop.f32.mrb[0].mxu0
    %719 = vdwg.mxu0
    %v720 = vadd.f32 %v40, %v712
    %v721 = vadd.f32 %v41, %v717
    %v722 = vlaneseq
    %v723 = vshrl.u32 %v722, 7
    %v724 = vsub.s32 0, %v723
    %v725 = vrot.slane %v95, %v724
    %v726 = vadd.f32 %v720, %v725
    %v727 = vadd.f32 %v721, %v725
    %v728 = vsel %vm98, %v726, 0.0
    %729 = vadd.xlane.f32.xlu0 %v728
    %v730 = vpop.xlane.xlu0 %729
    %v731 = vsel %vm98, %v727, 0.0
    %732 = vadd.xlane.f32.xlu0 %v731
    %v733 = vpop.xlane.xlu0 %732
    %v734 = vmul.f32 %v730, %v105
    %v735 = vmul.f32 %v733, %v105
    %v736 = vsub.f32 %v726, %v734
    %v737 = vsub.f32 %v727, %v735
    %v738 = vmul.f32 %v736, %v736
    %v739 = vmul.f32 %v737, %v737
    %v740 = vsel %vm98, %v738, 0.0
    %741 = vadd.xlane.f32.xlu0 %v740
    %v742 = vpop.xlane.xlu0 %741
    %v743 = vsel %vm98, %v739, 0.0
    %744 = vadd.xlane.f32.xlu0 %v743
    %v745 = vpop.xlane.xlu0 %744
    %v746 = vmul.f32 %v742, %v105
    %v747 = vmul.f32 %v745, %v105
    %v748 = vadd.f32 %v746, 1e-05
    %v749 = vadd.f32 %v747, 1e-05
    %v750 = vrsqrt.pop %v748
    %v751 = vrsqrt.pop %v749
    %v752 = vmul.f32 %v736, %v750
    %v753 = vmul.f32 %v737, %v751
    %v754 = vlaneseq
    %v755 = vshrl.u32 %v754, 7
    %v756 = vsub.s32 0, %v755
    %v757 = vrot.slane %v96, %v756
    %v759 = vsel %vm98, %v752, 0
    %v762 = vsel %vm98, %v753, 0
    %764 = vmatprep.subr.mxu0 0.0
    %765 = vmatpush1.msra.mxu0 %v46
    %766 = vmatprep.subr.mxu0 0.0
    %767 = vmatpush1.msra.mxu0 %v47
    %768 = vmatprep.subr.mxu0 0.0
    %769 = vmatpush1.msra.mxu0 %v48
    %770 = vmatprep.subr.mxu0 0.0
    %771 = vmatpush1.msra.mxu0 %v49
    %772 = vmatprep.subr.mxu0 0.0
    %773 = vmatpush1.msra.mxu0 0.0
    %774 = vmatprep.subr.mxu0 0.0
    %775 = vmatpush1.msra.mxu0 0.0
    %776 = vmatprep.subr.mxu0 0.0
    %777 = vmatpush1.msra.mxu0 0.0
    %778 = vmatprep.subr.mxu0 0.0
    %779 = vmatpush1.msra.mxu0 0.0
    %780 = vmatprep.subr.mxu0 0.0
    %781 = vmatpush1.msra.mxu0 0.0
    %782 = vmatprep.subr.mxu0 0.0
    %783 = vmatpush1.msra.mxu0 0.0
    %784 = vmatprep.subr.mxu0 0.0
    %785 = vmatpush1.msra.mxu0 0.0
    %786 = vmatprep.subr.mxu0 0.0
    %787 = vmatpush1.msra.mxu0 0.0
    %788 = vmatprep.subr.mxu0 0.0
    %789 = vmatpush1.msra.mxu0 0.0
    %790 = vmatprep.subr.mxu0 0.0
    %791 = vmatpush1.msra.mxu0 0.0
    %792 = vmatprep.subr.mxu0 0.0
    %793 = vmatpush1.msra.mxu0 0.0
    %794 = vmatprep.subr.mxu0 0.0
    %795 = vmatpush1.msra.mxu0 0.0
    %796 = vmatprep.subr.mxu0 0.0
    %797 = vmatpush1.msra.mxu0 0.0
    %798 = vmatprep.subr.mxu0 0.0
    %799 = vmatpush1.msra.mxu0 0.0
    %800 = vmatprep.subr.mxu0 0.0
    %801 = vmatpush1.msra.mxu0 0.0
    %802 = vmatprep.subr.mxu0 0.0
    %803 = vmatpush1.msra.mxu0 0.0
    %804 = vmatprep.subr.mxu0 0.0
    %805 = vmatpush1.msra.mxu0 0.0
    %806 = vmatprep.subr.mxu0 0.0
    %807 = vmatpush1.msra.mxu0 0.0
    %808 = vmatprep.subr.mxu0 0.0
    %809 = vmatpush1.msra.mxu0 0.0
    %810 = vmatprep.subr.mxu0 0.0
    %811 = vmatpush1.msra.mxu0 0.0
    %812 = vmatprep.subr.mxu0 0.0
    %813 = vmatpush1.msra.mxu0 0.0
    %814 = vmatprep.subr.mxu0 0.0
    %815 = vmatpush1.msra.mxu0 0.0
    %816 = vmatprep.subr.mxu0 0.0
    %817 = vmatpush1.msra.mxu0 0.0
    %818 = vmatprep.subr.mxu0 0.0
    %819 = vmatpush1.msra.mxu0 0.0
    %820 = vmatprep.subr.mxu0 0.0
    %821 = vmatpush1.msra.mxu0 0.0
    %822 = vmatprep.subr.mxu0 0.0
    %823 = vmatpush1.msra.mxu0 0.0
    %824 = vmatprep.subr.mxu0 0.0
    %825 = vmatpush1.msra.mxu0 0.0
    %826 = vmatprep.subr.mxu0 0.0
    %827 = vmatpush1.msra.mxu0 0.0
    %828 = vmatprep.mubr.f32.mxu0 0.0
    %829 = vmatmul.mubr.f32.gmra.mrb[0].mxu0 %v759
    %v830 = vpop.f32.mrb[0].mxu0
    %v831 = vadd.f32 %v757, %v830
    %v832 = vpop.f32.mrb[0].mxu0
    %833 = vmatprep.mubr.f32.mxu0 0.0
    %834 = vmatmul.mubr.f32.gmra.mrb[0].mxu0 %v762
    %v835 = vpop.f32.mrb[0].mxu0
    %v836 = vadd.f32 %v757, %v835
    %v837 = vpop.f32.mrb[0].mxu0
    %838 = vdwg.mxu0
    %v839 = vmul.f32 %v831, 0.5
    %v840 = vmul.f32 %v836, 0.5
    %v841 = vmul.f32 %v831, 0.70710677
    %v842 = vmul.f32 %v836, 0.70710677
    %v843 = vand.u32 2147483647, %v841
    %v844 = vand.u32 2147483647, %v842
    %v845 = vmul.f32 %v843, 0.3275911
    %v846 = vmul.f32 %v844, 0.3275911
    %v847 = vadd.f32 %v845, 1.0
    %v848 = vadd.f32 %v846, 1.0
    %v849 = vrcp.pop %v847
    %v850 = vmul.f32 1.0, %v849
    %v851 = vrcp.pop %v848
    %v852 = vmul.f32 1.0, %v851
    %v853 = vmul.f32 %v850, 1.0614054
    %v854 = vmul.f32 %v852, 1.0614054
    %v855 = vadd.f32 %v853, -1.4531521
    %v856 = vadd.f32 %v854, -1.4531521
    %v857 = vmul.f32 %v855, %v850
    %v858 = vmul.f32 %v856, %v852
    %v859 = vadd.f32 %v857, 1.4214138
    %v860 = vadd.f32 %v858, 1.4214138
    %v861 = vmul.f32 %v859, %v850
    %v862 = vmul.f32 %v860, %v852
    %v863 = vadd.f32 %v861, -0.28449672
    %v864 = vadd.f32 %v862, -0.28449672
    %v865 = vmul.f32 %v863, %v850
    %v866 = vmul.f32 %v864, %v852
    %v867 = vadd.f32 %v865, 0.2548296
    %v868 = vadd.f32 %v866, 0.2548296
    %v869 = vmul.f32 %v867, %v850
    %v870 = vmul.f32 %v868, %v852
    %v871 = vsub.f32 0.0, %v843
    %v872 = vsub.f32 0.0, %v844
    %v873 = vmul.f32 %v871, %v843
    %v874 = vmul.f32 %v872, %v844
    %v875 = vmul.f32 %v873, 1.442695
    %v876 = vpow.pop %v875
    %v877 = vmul.f32 %v874, 1.442695
    %v878 = vpow.pop %v877
    %v879 = vmul.f32 %v869, %v876
    %v880 = vmul.f32 %v870, %v878
    %v881 = vsub.f32 1.0, %v879
    %v882 = vsub.f32 1.0, %v880
    %vm883 = vcmp.ge.f32.partialorder %v841, 0.0
    %vm884 = vcmp.ge.f32.partialorder %v842, 0.0
    %v885 = vsub.f32 0.0, %v881
    %v886 = vsub.f32 0.0, %v882
    %v887 = vsel %vm883, %v881, %v885
    %v888 = vsel %vm884, %v882, %v886
    %v889 = vadd.f32 %v887, 1.0
    %v890 = vadd.f32 %v888, 1.0
    %v891 = vmul.f32 %v839, %v889
    %v892 = vmul.f32 %v840, %v890
    %893 = vmatprep.subr.mxu0 0.0
    %894 = vmatpush1.msra.mxu0 %v50
    %895 = vmatprep.subr.mxu0 0.0
    %896 = vmatpush1.msra.mxu0 %v51
    %897 = vmatprep.subr.mxu0 0.0
    %898 = vmatpush1.msra.mxu0 %v52
    %899 = vmatprep.subr.mxu0 0.0
    %900 = vmatpush1.msra.mxu0 %v53
    %901 = vmatprep.subr.mxu0 0.0
    %902 = vmatpush1.msra.mxu0 %v54
    %903 = vmatprep.subr.mxu0 0.0
    %904 = vmatpush1.msra.mxu0 %v55
    %905 = vmatprep.subr.mxu0 0.0
    %906 = vmatpush1.msra.mxu0 %v56
    %907 = vmatprep.subr.mxu0 0.0
    %908 = vmatpush1.msra.mxu0 %v57
    %909 = vmatprep.subr.mxu0 0.0
    %910 = vmatpush1.msra.mxu0 %v58
    %911 = vmatprep.subr.mxu0 0.0
    %912 = vmatpush1.msra.mxu0 %v59
    %913 = vmatprep.subr.mxu0 0.0
    %914 = vmatpush1.msra.mxu0 %v60
    %915 = vmatprep.subr.mxu0 0.0
    %916 = vmatpush1.msra.mxu0 %v61
    %917 = vmatprep.subr.mxu0 0.0
    %918 = vmatpush1.msra.mxu0 %v62
    %919 = vmatprep.subr.mxu0 0.0
    %920 = vmatpush1.msra.mxu0 %v63
    %921 = vmatprep.subr.mxu0 0.0
    %922 = vmatpush1.msra.mxu0 %v64
    %923 = vmatprep.subr.mxu0 0.0
    %924 = vmatpush1.msra.mxu0 %v65
    %925 = vmatprep.subr.mxu0 0.0
    %926 = vmatpush1.msra.mxu0 0.0
    %927 = vmatprep.subr.mxu0 0.0
    %928 = vmatpush1.msra.mxu0 0.0
    %929 = vmatprep.subr.mxu0 0.0
    %930 = vmatpush1.msra.mxu0 0.0
    %931 = vmatprep.subr.mxu0 0.0
    %932 = vmatpush1.msra.mxu0 0.0
    %933 = vmatprep.subr.mxu0 0.0
    %934 = vmatpush1.msra.mxu0 0.0
    %935 = vmatprep.subr.mxu0 0.0
    %936 = vmatpush1.msra.mxu0 0.0
    %937 = vmatprep.subr.mxu0 0.0
    %938 = vmatpush1.msra.mxu0 0.0
    %939 = vmatprep.subr.mxu0 0.0
    %940 = vmatpush1.msra.mxu0 0.0
    %941 = vmatprep.subr.mxu0 0.0
    %942 = vmatpush1.msra.mxu0 0.0
    %943 = vmatprep.subr.mxu0 0.0
    %944 = vmatpush1.msra.mxu0 0.0
    %945 = vmatprep.subr.mxu0 0.0
    %946 = vmatpush1.msra.mxu0 0.0
    %947 = vmatprep.subr.mxu0 0.0
    %948 = vmatpush1.msra.mxu0 0.0
    %949 = vmatprep.subr.mxu0 0.0
    %950 = vmatpush1.msra.mxu0 0.0
    %951 = vmatprep.subr.mxu0 0.0
    %952 = vmatpush1.msra.mxu0 0.0
    %953 = vmatprep.subr.mxu0 0.0
    %954 = vmatpush1.msra.mxu0 0.0
    %955 = vmatprep.subr.mxu0 0.0
    %956 = vmatpush1.msra.mxu0 0.0
    %957 = vmatprep.mubr.f32.mxu0 0.0
    %958 = vmatmul.mubr.f32.gmra.mrb[0].mxu0 %v891
    %v959 = vpop.f32.mrb[0].mxu0
    %v960 = vadd.f32 0.0, %v959
    %v961 = vpop.f32.mrb[0].mxu0
    %962 = vmatprep.mubr.f32.mxu0 0.0
    %963 = vmatmul.mubr.f32.gmra.mrb[0].mxu0 %v892
    %v964 = vpop.f32.mrb[0].mxu0
    %v965 = vadd.f32 0.0, %v964
    %v966 = vpop.f32.mrb[0].mxu0
    %967 = vdwg.mxu0
    %v968 = vadd.f32 %v726, %v960
    %v969 = vadd.f32 %v727, %v965
    %v970 = vlaneseq
    %v971 = vshrl.u32 %v970, 7
    %v972 = vsub.s32 0, %v971
    %v973 = vrot.slane %v97, %v972
    %v974 = vadd.f32 %v968, %v973
    %v975 = vadd.f32 %v969, %v973
    %976 = vst.msk [vmem:[#allocation7] sm:$0xff] %vm98, %v974
    %977 = vst.msk [vmem:[#allocation7 + $0x8] sm:$0xff] %vm98, %v975
    // Predicated region
    $region18: #{tpu_custom_call.1} parent=1 // pred_check
      _
    $region19: #{tpu_custom_call.1} parent=1 // pred_check_branch
      %979 = sbr.rel (0) target = $region21
    $region20: #{tpu_custom_call.1} parent=1 // pred_region
      %s981 = ssub.s32 256, 256
      %982 = vsyncadd [#allocation4], %s981
      %s983 = sshll.u32 [#allocation7], 4
      %s984 = int_to_ptr.vmem [resolvable:$true] %s983
      %989 = dma.vmem_to_hbm [thread:$0]  %s984, 256, %s2, [#allocation4], 128, 128, 8
    $region21: #{tpu_custom_call.1} parent=1 // pred_fallthru
      _
    // Predicated region
    $region22: #{tpu_custom_call.1} parent=1 // pred_check
      _
    $region23: #{tpu_custom_call.1} parent=1 // pred_check_branch
      %991 = sbr.rel (0) target = $region25
    $region24: #{tpu_custom_call.1} parent=1 // pred_region
      %992 = dma.done [#allocation4], 256
    $region25: #{tpu_custom_call.1} parent=1 // pred_fallthru
      _
    %993 = vsyncpa [#allocation3], 1
    %994 = vsyncpa [#allocation6], 1
    %995 = vsyncpa [#allocation4], 1

</llo_original>
